<compile_context>
chip_gen: v6e
topology: v6e:2x2x1
jax: 0.10.0
libtpu: 0.0.40
codegen_flags: <defaults>
</compile_context>

<pallas_src>
import jax
import jax.numpy as jnp
from jax.experimental import pallas as pl
from jax.experimental.pallas import tpu as pltpu

# Safe scoped-VMEM ceiling on every generation (v7x physical = 64 MiB).
_VMEM_LIMIT_CAP = 40 * 1024 * 1024
_HEADROOM = 8 * 1024 * 1024


def _h_sigmoid_kernel(x_ref, o_ref):
    x = x_ref[...]
    # relu6(x + 3) / 6  ==  clamp(x + 3, 0, 6) / 6
    # Python-float constants are weak-typed, so bf16/fp16 inputs stay packed.
    o_ref[...] = (jnp.clip(x + 3.0, 0.0, 6.0) / 6.0).astype(o_ref.dtype)


def h_sigmoid(x: jax.Array, *, donate: bool = False) -> jax.Array:
    """Elementwise hard-sigmoid matching torch: ReLU6(x + 3) / 6."""
    orig_shape = x.shape
    dtype = x.dtype
    itemsize = jnp.dtype(dtype).itemsize

    flat = x.reshape(-1)
    n = flat.shape[0]
    if n == 0:
        return x

    cost = pl.CostEstimate(flops=4 * n, transcendentals=0,
                           bytes_accessed=2 * n * itemsize)
    io_alias = {0: 0} if donate else {}

    # Packed-dtype sublane tile: 8 rows for 4-byte, 16 for 2-byte, 32 for 1-byte.
    sublane = max(8, 32 // itemsize)

    if n % 128 == 0:
        # ------------- aligned fast path: lane-dense 2-D slab ----------------
        width = 128
        for w in (1024, 512, 256, 128):
            if n % w == 0:
                width = w
                break
        rows = n // width
        x2d = flat.reshape(rows, width)

        # Target ~4 MiB per block; double-buffered in+out => ~16 MiB of VMEM.
        target_block_bytes = 4 * 1024 * 1024
        target_rows = max(sublane, target_block_bytes // (width * itemsize))
        target_rows = max(sublane, (target_rows // sublane) * sublane)
        row_tile = min(rows, target_rows)

        # Megacore balance (v7x has 2 TensorCores on the "parallel" axis):
        # guarantee >= 4 grid steps (>= 2 for mid-size inputs) when rows allow.
        if rows >= 4 * sublane:
            cap = max(sublane, (pl.cdiv(rows, 4) // sublane) * sublane)
            row_tile = min(row_tile, cap)
        elif rows >= 2 * sublane:
            cap = max(sublane, (pl.cdiv(rows, 2) // sublane) * sublane)
            row_tile = min(row_tile, cap)
        # row_tile is now a multiple of `sublane` (>= 8) or equals `rows`
        # (full dim), and width is a multiple of 128 -> legal block shape.

        block_bytes = row_tile * width * itemsize
        vmem_limit = min(_VMEM_LIMIT_CAP, 4 * block_bytes + 2 * _HEADROOM)

        grid = (pl.cdiv(rows, row_tile),)
        out2d = pl.pallas_call(
            _h_sigmoid_kernel,
            out_shape=jax.ShapeDtypeStruct((rows, width), dtype),
            grid_spec=pltpu.PrefetchScalarGridSpec(
                num_scalar_prefetch=0,
                grid=grid,
                in_specs=[pl.BlockSpec((row_tile, width), lambda i: (i, 0))],
                out_specs=pl.BlockSpec((row_tile, width), lambda i: (i, 0)),
            ),
            compiler_params=pltpu.CompilerParams(
                dimension_semantics=("parallel",),
                vmem_limit_bytes=vmem_limit,
            ),
            cost_estimate=cost,
            input_output_aliases=io_alias,
        )(x2d)
        return out2d.reshape(orig_shape)

    # ------------- ragged path: no pad, no slice, still 1R + 1W --------------
    # View the flat tensor as (1, n).  The lane-dim block is a multiple of 128
    # (or equals n for small inputs); Pallas masks the partial edge block, so
    # we never materialize a padded copy or slice the output.
    x2d = flat.reshape(1, n)
    lane_block = 65536  # elements per grid step
    if n <= lane_block:
        block_w = n           # full-array block: legal for any n
    else:
        block_w = lane_block  # multiple of 128: legal; edge block is masked
    grid = (pl.cdiv(n, block_w),)

    # (1, W) VMEM buffers pad the sublane dim to a full tile (~32 bytes/lane
    # worst case across dtypes); budget for 2 double-buffered arrays.
    padded_block_bytes = 32 * ((block_w + 127) // 128) * 128
    vmem_limit = min(_VMEM_LIMIT_CAP, 4 * padded_block_bytes + _HEADROOM)

    out2d = pl.pallas_call(
        _h_sigmoid_kernel,
        out_shape=jax.ShapeDtypeStruct((1, n), dtype),
        grid_spec=pltpu.PrefetchScalarGridSpec(
            num_scalar_prefetch=0,
            grid=grid,
            in_specs=[pl.BlockSpec((1, block_w), lambda i: (0, i))],
            out_specs=pl.BlockSpec((1, block_w), lambda i: (0, i)),
        ),
        compiler_params=pltpu.CompilerParams(
            dimension_semantics=("parallel",),
            vmem_limit_bytes=vmem_limit,
        ),
        cost_estimate=cost,
        input_output_aliases=io_alias,
    )(x2d)
    return out2d.reshape(orig_shape)


if __name__ == "__main__":
    def ref_fn(v):
        return jnp.clip(v + 3.0, 0.0, 6.0) / 6.0

    # 1) NCHW input, same convention as the PyTorch module.
    x = jax.random.normal(jax.random.PRNGKey(0), (2, 4, 16, 16), jnp.float32) * 4.0
    out = jax.block_until_ready(h_sigmoid(x))
    assert out.shape == x.shape and out.dtype == x.dtype
    assert jnp.allclose(out, ref_fn(x), atol=1e-6), "mismatch (aligned, small)"

    # 2) Larger aligned input -> multi-step "parallel" grid (megacore path).
    x1 = jax.random.normal(jax.random.PRNGKey(1), (8, 32, 32, 32), jnp.float32) * 4.0
    out1 = jax.block_until_ready(h_sigmoid(x1))
    assert jnp.allclose(out1, ref_fn(x1), atol=1e-6), "mismatch (aligned, multi-block)"

    # 3) Ragged (non-128-multiple) size, single-block path: no pad, no slice.
    x2 = jax.random.normal(jax.random.PRNGKey(2), (3, 5, 7), jnp.float32) * 4.0
    out2 = jax.block_until_ready(h_sigmoid(x2))
    assert out2.shape == x2.shape
    assert jnp.allclose(out2, ref_fn(x2), atol=1e-6), "mismatch (ragged, small)"

    # 4) Ragged size larger than one lane block -> exercises the masked edge block.
    x3 = jax.random.normal(jax.random.PRNGKey(3), (65536 + 7,), jnp.float32) * 4.0
    out3 = jax.block_until_ready(h_sigmoid(x3))
    assert jnp.allclose(out3, ref_fn(x3), atol=1e-6), "mismatch (ragged, multi-block)"

    # 5) bf16 packed-dtype path.
    x4 = (jax.random.normal(jax.random.PRNGKey(4), (4, 8, 16, 16)) * 4.0).astype(jnp.bfloat16)
    out4 = jax.block_until_ready(h_sigmoid(x4))
    assert out4.dtype == jnp.bfloat16
    assert jnp.allclose(out4.astype(jnp.float32),
                        ref_fn(x4.astype(jnp.float32)), atol=2e-2), "mismatch (bf16)"

    print("KERNEL_OK")
</pallas_src>

<mosaic_0001>
module attributes {stable_mosaic.version = 11 : i64} {
  func.func @_h_sigmoid_kernel(%arg0: i32, %arg1: memref<2x1024xf32, #tpu.memory_space<vmem>>, %arg2: memref<2x1024xf32, #tpu.memory_space<vmem>>) attributes {dimension_semantics = [#tpu.dimension_semantics<parallel>], iteration_bounds = array<i64: 1>, scalar_prefetch = 0 : i64, scratch_operands = 0 : i64, tpu.core_type = #tpu.core_type<tc>, window_params = [{transform_indices = @transform_0, window_bounds = array<i64: 2, 1024>}, {transform_indices = @transform_1, window_bounds = array<i64: 2, 1024>}]} {
    %c0 = arith.constant 0 : index
    %c0_0 = arith.constant 0 : index
    %0 = vector.load %arg1[%c0, %c0_0] : memref<2x1024xf32, #tpu.memory_space<vmem>>, vector<2x1024xf32>
    %cst = arith.constant 3.000000e+00 : f32
    %1 = vector.broadcast %cst : f32 to vector<2x1024xf32>
    %2 = arith.addf %0, %1 : vector<2x1024xf32>
    %cst_1 = arith.constant 0.000000e+00 : f32
    %cst_2 = arith.constant 6.000000e+00 : f32
    %3 = vector.broadcast %cst_1 : f32 to vector<2x1024xf32>
    %4 = arith.maximumf %3, %2 : vector<2x1024xf32>
    %5 = vector.broadcast %cst_2 : f32 to vector<2x1024xf32>
    %6 = arith.minimumf %5, %4 : vector<2x1024xf32>
    %cst_3 = arith.constant 6.000000e+00 : f32
    %7 = vector.broadcast %cst_3 : f32 to vector<2x1024xf32>
    %8 = arith.divf %6, %7 : vector<2x1024xf32>
    %c0_4 = arith.constant 0 : index
    %c0_5 = arith.constant 0 : index
    %9 = vector.load %arg2[%c0_4, %c0_5] : memref<2x1024xf32, #tpu.memory_space<vmem>>, vector<2x1024xf32>
    tpu.vector_store %arg2[%c0_4, %c0_5], %8 {strides = array<i32>} : memref<2x1024xf32, #tpu.memory_space<vmem>>, vector<2x1024xf32>,
    return
  }
  func.func @transform_0(%arg0: i32) -> (i32, i32) {
    %c0_i32 = arith.constant 0 : i32
    %c0_i32_0 = arith.constant 0 : i32
    return %arg0, %c0_i32 : i32, i32
  }
  func.func @transform_1(%arg0: i32) -> (i32, i32) {
    %c0_i32 = arith.constant 0 : i32
    %c0_i32_0 = arith.constant 0 : i32
    return %arg0, %c0_i32 : i32, i32
  }
}

</mosaic_0001>

<llo_original>
// kernel: tpu_custom_call.1
$region0: #{tpu_custom_call.1}
  #allocation0 [shape = 'u32[]', space=smem, size = 0x4, offset = 0x4, fixed_abs, tag = 'smem constant byte address 0x4 - core index']
  #allocation1 [shape = 'u32[144,128]{1,0:T(1,128)}', space=vmem, size = 0x12000, scoped, tag = 'internal scratch']
  %s0 = inlined_call_operand.hbm [shape: f32[2,1024], index: 0, kind: input, shape index: {}]
  %s1 = inlined_call_operand.hbm [shape: f32[2,1024], index: 1, kind: output, shape index: {}]
  %s2 = sld [smem:[#allocation0]]
  $region18: #{tpu_custom_call.1} parent=0
    _
  %s4 = ssub.s32 1, %s2
  %s5 = scalar_select 0, %s4, %s2
  $region1: #{tpu_custom_call.1} parent=0
    #allocation2 [shape = 'u8[8192]{0}', space=vmem, size = 0x2000, scoped, tag = 'input window, operand 0, single buffered']
    #allocation3 [shape = 's32[1]{0}', space=sflag, size = 0x4, scoped, tag = 'scoped memory for tpu_custom_call.1']
    #allocation4 [shape = 's32[1]{0}', space=sflag, size = 0x4, scoped, tag = 'scoped memory for tpu_custom_call.1']
    #allocation5 [shape = 'u8[8192]{0}', space=vmem, size = 0x2000, scoped, tag = 'output window, operand 0, single buffered']
    %6 = vsyncpa [#allocation3], 0
    %7 = vsyncpa [#allocation4], 0
    // Predicated region
    $region2: #{tpu_custom_call.1} parent=1 // pred_check
      _
    $region3: #{tpu_custom_call.1} parent=1 // pred_check_branch
      %9 = sbr.rel (0) target = $region5
    $region4: #{tpu_custom_call.1} parent=1 // pred_region
      %s11 = ssub.s32 256, 256
      %12 = vsyncadd [#allocation3], %s11
      %s14 = sshll.u32 [#allocation2], 4
      %s15 = int_to_ptr.vmem [resolvable:$true] %s14
      %17 = dma.hbm_to_vmem [thread:$0]  %s0, 256, %s15, [#allocation3]
    $region5: #{tpu_custom_call.1} parent=1 // pred_fallthru
      _
    // Predicated region
    $region6: #{tpu_custom_call.1} parent=1 // pred_check
      _
    $region7: #{tpu_custom_call.1} parent=1 // pred_check_branch
      %19 = sbr.rel (0) target = $region9
    $region8: #{tpu_custom_call.1} parent=1 // pred_region
      %20 = dma.done [#allocation3], 256
    $region9: #{tpu_custom_call.1} parent=1 // pred_fallthru
      _
    %v21 = vld [vmem:[#allocation2] sm:$0xff]
    %v22 = vld [vmem:[#allocation2 + $0x8] sm:$0xff]
    %v23 = vadd.f32 %v21, 3.0
    %v24 = vadd.f32 %v22, 3.0
    %v25 = vmax.f32 %v23, 0.0
    %v26 = vmax.f32 %v24, 0.0
    %v27 = vmin.f32 %v25, 6.0
    %v28 = vmin.f32 %v26, 6.0
    %v29 = vrcp.pop 6.0
    %v30 = vmul.f32 %v27, %v29
    %v31 = vmul.f32 %v28, %v29
    %32 = vst [vmem:[#allocation5] sm:$0xff] %v30
    %33 = vst [vmem:[#allocation5 + $0x8] sm:$0xff] %v31
    // Predicated region
    $region10: #{tpu_custom_call.1} parent=1 // pred_check
      _
    $region11: #{tpu_custom_call.1} parent=1 // pred_check_branch
      %35 = sbr.rel (0) target = $region13
    $region12: #{tpu_custom_call.1} parent=1 // pred_region
      %s37 = ssub.s32 256, 256
      %38 = vsyncadd [#allocation4], %s37
      %s40 = sshll.u32 [#allocation5], 4
      %s41 = int_to_ptr.vmem [resolvable:$true] %s40
      %43 = dma.vmem_to_hbm [thread:$0]  %s41, 256, %s1, [#allocation4]
    $region13: #{tpu_custom_call.1} parent=1 // pred_fallthru
      _
    // Predicated region
    $region14: #{tpu_custom_call.1} parent=1 // pred_check
      _
    $region15: #{tpu_custom_call.1} parent=1 // pred_check_branch
      %45 = sbr.rel (0) target = $region17
    $region16: #{tpu_custom_call.1} parent=1 // pred_region
      %46 = dma.done [#allocation4], 256
    $region17: #{tpu_custom_call.1} parent=1 // pred_fallthru
      _
    %47 = vsyncpa [#allocation3], 1
    %48 = vsyncpa [#allocation4], 1

</llo_original>
